<compile_context>
chip_gen: v6e
topology: v6e:2x2x1
jax: 0.10.0
libtpu: 0.0.40
codegen_flags: <defaults>
</compile_context>

<pallas_src>
import functools

import numpy as np
import jax
import jax.numpy as jnp
from jax.experimental import pallas as pl
from jax.experimental.pallas import tpu as pltpu


def _round_up(x, m):
    return (x + m - 1) // m * m


# ----------------------------------------------------------------------------
# Pallas kernels: fused patch projection (+ optional LayerNorm)
# ----------------------------------------------------------------------------
def _proj_kernel(x_ref, w_ref, b_ref, o_ref):
    # x_ref: (TM, K) bf16, w_ref: (K, E) bf16, b_ref: (1, E) f32
    y = jnp.dot(x_ref[...], w_ref[...], preferred_element_type=jnp.float32)
    o_ref[...] = y + b_ref[...]


def _proj_ln_kernel(x_ref, w_ref, b_ref, g_ref, beta_ref, o_ref, *, eps):
    y = jnp.dot(x_ref[...], w_ref[...], preferred_element_type=jnp.float32)
    y = y + b_ref[...]
    mu = jnp.mean(y, axis=-1, keepdims=True)
    var = jnp.mean((y - mu) ** 2, axis=-1, keepdims=True)
    o_ref[...] = (y - mu) * jax.lax.rsqrt(var + eps) * g_ref[...] + beta_ref[...]


# ----------------------------------------------------------------------------
# Wrapper: PatchEmbed.forward
#   x: (B, C_in, H, W)  ->  (B, num_patches, embed_dim)
# ----------------------------------------------------------------------------
def patch_embed_forward(x, params, *, patch_size, norm=True, eps=1e-5, row_tile=256):
    B, C, H, W = x.shape
    p = patch_size
    assert H % p == 0 and W % p == 0
    Hp, Wp = H // p, W // p
    K = C * p * p
    E = params["proj_w"].shape[0]

    # im2col: one fused XLA transpose pass NCHW -> (B*Hp*Wp, C*p*p), cast to bf16
    # (ordering (c, i, j) matches Conv2d weight layout (E, C, p, p) flattened).
    patches = x.reshape(B, C, Hp, p, Wp, p).transpose(0, 2, 4, 1, 3, 5)
    patches = patches.reshape(B * Hp * Wp, K).astype(jnp.bfloat16)

    w_t = params["proj_w"].reshape(E, K).T.astype(jnp.bfloat16)          # (K, E)
    bias = params["proj_b"].reshape(1, E).astype(jnp.float32)

    rows = patches.shape[0]
    tm = min(row_tile, _round_up(rows, 8))                               # MXU row batch
    rows_p = _round_up(rows, tm)
    if rows_p != rows:
        patches = jnp.pad(patches, ((0, rows_p - rows), (0, 0)))
    grid = (rows_p // tm,)

    x_spec = pl.BlockSpec((tm, K), lambda i: (i, 0))
    # Constant-index weight/bias blocks; tiny here (KxE bf16), so default double
    # buffering is harmless.  At large E use pipeline_mode=pl.Buffered(1).
    w_spec = pl.BlockSpec((K, E), lambda i: (0, 0))
    v_spec = pl.BlockSpec((1, E), lambda i: (0, 0))
    o_spec = pl.BlockSpec((tm, E), lambda i: (i, 0))

    if norm:
        gamma = params["norm_g"].reshape(1, E).astype(jnp.float32)
        beta = params["norm_b"].reshape(1, E).astype(jnp.float32)
        kernel = functools.partial(_proj_ln_kernel, eps=eps)
        in_specs = [x_spec, w_spec, v_spec, v_spec, v_spec]
        args = (patches, w_t, bias, gamma, beta)
    else:
        kernel = _proj_kernel
        in_specs = [x_spec, w_spec, v_spec]
        args = (patches, w_t, bias)

    out = pl.pallas_call(
        kernel,
        out_shape=jax.ShapeDtypeStruct((rows_p, E), jnp.float32),
        grid=grid,
        in_specs=in_specs,
        out_specs=o_spec,
        compiler_params=pltpu.CompilerParams(dimension_semantics=("parallel",)),
    )(*args)

    return out[:rows].reshape(B, Hp * Wp, E)


# ----------------------------------------------------------------------------
# Pure-JAX (f32) reference of the same forward (Conv2d stride=kernel=p + LN)
# ----------------------------------------------------------------------------
def patch_embed_ref(x, params, *, patch_size, norm=True, eps=1e-5):
    B, C, H, W = x.shape
    p = patch_size
    Hp, Wp = H // p, W // p
    E = params["proj_w"].shape[0]
    K = C * p * p
    patches = x.reshape(B, C, Hp, p, Wp, p).transpose(0, 2, 4, 1, 3, 5)
    patches = patches.reshape(B, Hp * Wp, K)
    y = patches @ params["proj_w"].reshape(E, K).T + params["proj_b"]
    if norm:
        mu = y.mean(-1, keepdims=True)
        var = ((y - mu) ** 2).mean(-1, keepdims=True)
        y = (y - mu) * jax.lax.rsqrt(var + eps) * params["norm_g"] + params["norm_b"]
    return y


# ----------------------------------------------------------------------------
# Main: small, module-consistent shapes
# ----------------------------------------------------------------------------
if __name__ == "__main__":
    B, C_in, H, W = 2, 3, 64, 64
    patch_size = 4
    embed_dim = 128                      # lane-dense output (multiple of 128)
    K = C_in * patch_size * patch_size   # 48

    key = jax.random.PRNGKey(0)
    kx, kw, kb, kg, kbe = jax.random.split(key, 5)
    x = jax.random.normal(kx, (B, C_in, H, W), jnp.float32)
    params = {
        "proj_w": (1.0 / np.sqrt(K))
        * jax.random.normal(kw, (embed_dim, C_in, patch_size, patch_size), jnp.float32),
        "proj_b": 0.02 * jax.random.normal(kb, (embed_dim,), jnp.float32),
        "norm_g": 1.0 + 0.1 * jax.random.normal(kg, (embed_dim,), jnp.float32),
        "norm_b": 0.05 * jax.random.normal(kbe, (embed_dim,), jnp.float32),
    }

    num_patches = (H // patch_size) * (W // patch_size)

    # With LayerNorm (norm_layer=nn.LayerNorm)
    fwd_ln = jax.jit(functools.partial(patch_embed_forward, patch_size=patch_size, norm=True))
    out_ln = jax.block_until_ready(fwd_ln(x, params))
    ref_ln = patch_embed_ref(x, params, patch_size=patch_size, norm=True)
    assert out_ln.shape == (B, num_patches, embed_dim)
    assert jnp.allclose(out_ln, ref_ln, atol=7.5e-2, rtol=7.5e-2), float(
        jnp.max(jnp.abs(out_ln - ref_ln)))

    # Without norm (norm_layer=None)
    fwd = jax.jit(functools.partial(patch_embed_forward, patch_size=patch_size, norm=False))
    out = jax.block_until_ready(fwd(x, params))
    ref = patch_embed_ref(x, params, patch_size=patch_size, norm=False)
    assert out.shape == (B, num_patches, embed_dim)
    assert jnp.allclose(out, ref, atol=7.5e-2, rtol=7.5e-2), float(
        jnp.max(jnp.abs(out - ref)))

    print("KERNEL_OK")
</pallas_src>

<mosaic_0001>
module attributes {stable_mosaic.version = 11 : i64} {
  func.func @_proj_ln_kernel(%arg0: i32, %arg1: memref<256x48xbf16, #tpu.memory_space<vmem>>, %arg2: memref<48x128xbf16, #tpu.memory_space<vmem>>, %arg3: memref<1x128xf32, #tpu.memory_space<vmem>>, %arg4: memref<1x128xf32, #tpu.memory_space<vmem>>, %arg5: memref<1x128xf32, #tpu.memory_space<vmem>>, %arg6: memref<256x128xf32, #tpu.memory_space<vmem>>) attributes {dimension_semantics = [#tpu.dimension_semantics<parallel>], iteration_bounds = array<i64: 2>, scalar_prefetch = 0 : i64, scratch_operands = 0 : i64, tpu.core_type = #tpu.core_type<tc>, window_params = [{transform_indices = @transform_0, window_bounds = array<i64: 256, 48>}, {pipeline_mode = #tpu.pipeline_mode<synchronous>, transform_indices = @transform_1, window_bounds = array<i64: 48, 128>}, {pipeline_mode = #tpu.pipeline_mode<synchronous>, transform_indices = @transform_2, window_bounds = array<i64: 1, 128>}, {pipeline_mode = #tpu.pipeline_mode<synchronous>, transform_indices = @transform_3, window_bounds = array<i64: 1, 128>}, {pipeline_mode = #tpu.pipeline_mode<synchronous>, transform_indices = @transform_4, window_bounds = array<i64: 1, 128>}, {transform_indices = @transform_5, window_bounds = array<i64: 256, 128>}]} {
    %c0 = arith.constant 0 : index
    %c0_0 = arith.constant 0 : index
    %0 = vector.load %arg1[%c0, %c0_0] : memref<256x48xbf16, #tpu.memory_space<vmem>>, vector<256x48xbf16>
    %c0_1 = arith.constant 0 : index
    %c0_2 = arith.constant 0 : index
    %1 = vector.load %arg2[%c0_1, %c0_2] : memref<48x128xbf16, #tpu.memory_space<vmem>>, vector<48x128xbf16>
    %cst = arith.constant dense<0.000000e+00> : vector<256x128xf32>
    %2 = tpu.matmul %0, %1, %cst {dimension_numbers = #tpu.dot_dimension_numbers<[1], [0], [0], [1], [0, 0, 1, 1], [], []>} : vector<256x48xbf16>, vector<48x128xbf16>, vector<256x128xf32> -> vector<256x128xf32>
    %c0_3 = arith.constant 0 : index
    %c0_4 = arith.constant 0 : index
    %3 = vector.load %arg3[%c0_3, %c0_4] : memref<1x128xf32, #tpu.memory_space<vmem>>, vector<1x128xf32>
    %4 = vector.broadcast %3 : vector<1x128xf32> to vector<256x128xf32>
    %5 = arith.addf %2, %4 : vector<256x128xf32>
    %cst_5 = arith.constant dense<0.000000e+00> : vector<256xf32>
    %6 = vector.multi_reduction <add>, %5, %cst_5 [1] : vector<256x128xf32> to vector<256xf32>
    %7 = vector.shape_cast %6 : vector<256xf32> to vector<256x1xf32>
    %cst_6 = arith.constant 1.280000e+02 : f32
    %8 = vector.broadcast %cst_6 : f32 to vector<256x1xf32>
    %9 = arith.divf %7, %8 : vector<256x1xf32>
    %10 = vector.broadcast %9 : vector<256x1xf32> to vector<256x128xf32>
    %11 = arith.subf %5, %10 : vector<256x128xf32>
    %12 = arith.mulf %11, %11 : vector<256x128xf32>
    %cst_7 = arith.constant dense<0.000000e+00> : vector<256xf32>
    %13 = vector.multi_reduction <add>, %12, %cst_7 [1] : vector<256x128xf32> to vector<256xf32>
    %14 = vector.shape_cast %13 : vector<256xf32> to vector<256x1xf32>
    %cst_8 = arith.constant 1.280000e+02 : f32
    %15 = vector.broadcast %cst_8 : f32 to vector<256x1xf32>
    %16 = arith.divf %14, %15 : vector<256x1xf32>
    %17 = vector.broadcast %9 : vector<256x1xf32> to vector<256x128xf32>
    %18 = arith.subf %5, %17 : vector<256x128xf32>
    %cst_9 = arith.constant 9.99999974E-6 : f32
    %19 = vector.broadcast %cst_9 : f32 to vector<256x1xf32>
    %20 = arith.addf %16, %19 : vector<256x1xf32>
    %21 = math.rsqrt %20 : vector<256x1xf32>
    %22 = vector.broadcast %21 : vector<256x1xf32> to vector<256x128xf32>
    %23 = arith.mulf %18, %22 : vector<256x128xf32>
    %c0_10 = arith.constant 0 : index
    %c0_11 = arith.constant 0 : index
    %24 = vector.load %arg4[%c0_10, %c0_11] : memref<1x128xf32, #tpu.memory_space<vmem>>, vector<1x128xf32>
    %25 = vector.broadcast %24 : vector<1x128xf32> to vector<256x128xf32>
    %26 = arith.mulf %23, %25 : vector<256x128xf32>
    %c0_12 = arith.constant 0 : index
    %c0_13 = arith.constant 0 : index
    %27 = vector.load %arg5[%c0_12, %c0_13] : memref<1x128xf32, #tpu.memory_space<vmem>>, vector<1x128xf32>
    %28 = vector.broadcast %27 : vector<1x128xf32> to vector<256x128xf32>
    %29 = arith.addf %26, %28 : vector<256x128xf32>
    %c0_14 = arith.constant 0 : index
    %c0_15 = arith.constant 0 : index
    %30 = vector.load %arg6[%c0_14, %c0_15] : memref<256x128xf32, #tpu.memory_space<vmem>>, vector<256x128xf32>
    tpu.vector_store %arg6[%c0_14, %c0_15], %29 {strides = array<i32>} : memref<256x128xf32, #tpu.memory_space<vmem>>, vector<256x128xf32>,
    return
  }
  func.func @transform_0(%arg0: i32) -> (i32, i32) {
    %c0_i32 = arith.constant 0 : i32
    %c0_i32_0 = arith.constant 0 : i32
    return %arg0, %c0_i32 : i32, i32
  }
  func.func @transform_1(%arg0: i32) -> (i32, i32) {
    %c0_i32 = arith.constant 0 : i32
    %c0_i32_0 = arith.constant 0 : i32
    %c0_i32_1 = arith.constant 0 : i32
    return %c0_i32, %c0_i32_0 : i32, i32
  }
  func.func @transform_2(%arg0: i32) -> (i32, i32) {
    %c0_i32 = arith.constant 0 : i32
    %c0_i32_0 = arith.constant 0 : i32
    %c0_i32_1 = arith.constant 0 : i32
    return %c0_i32, %c0_i32_0 : i32, i32
  }
  func.func @transform_3(%arg0: i32) -> (i32, i32) {
    %c0_i32 = arith.constant 0 : i32
    %c0_i32_0 = arith.constant 0 : i32
    %c0_i32_1 = arith.constant 0 : i32
    return %c0_i32, %c0_i32_0 : i32, i32
  }
  func.func @transform_4(%arg0: i32) -> (i32, i32) {
    %c0_i32 = arith.constant 0 : i32
    %c0_i32_0 = arith.constant 0 : i32
    %c0_i32_1 = arith.constant 0 : i32
    return %c0_i32, %c0_i32_0 : i32, i32
  }
  func.func @transform_5(%arg0: i32) -> (i32, i32) {
    %c0_i32 = arith.constant 0 : i32
    %c0_i32_0 = arith.constant 0 : i32
    return %arg0, %c0_i32 : i32, i32
  }
}

</mosaic_0001>

<llo_original>
// kernel: patch_embed_forward.1
$region0: #{patch_embed_forward.1}
  #allocation0 [shape = 'u32[]', space=smem, size = 0x4, offset = 0x4, fixed_abs, tag = 'smem constant byte address 0x4 - core index']
  #allocation1 [shape = 'u32[144,128]{1,0:T(1,128)}', space=vmem, size = 0x12000, scoped, tag = 'internal scratch']
  %s0 = inlined_call_operand.vmem [shape: bf16[512,48], index: 0, kind: input, shape index: {}]
  %s1 = inlined_call_operand.vmem [shape: bf16[48,128], index: 1, kind: input, shape index: {}]
  %s2 = inlined_call_operand.vmem [shape: f32[1,128], index: 2, kind: input, shape index: {}]
  %s3 = inlined_call_operand.vmem [shape: f32[1,128], index: 3, kind: input, shape index: {}]
  %s4 = inlined_call_operand.vmem [shape: f32[1,128], index: 4, kind: input, shape index: {}]
  %s5 = inlined_call_operand.hbm [shape: f32[512,128], index: 5, kind: output, shape index: {}]
  %s6 = sld [smem:[#allocation0]]
  $region53: #{patch_embed_forward.1} parent=0
    _
  %s8 = ssub.s32 1, %s6
  %s9 = scalar_select 0, %s8, %s6
  $region1: #{patch_embed_forward.1} parent=0
    #allocation2 [shape = 'u8[262144]{0}', space=vmem, size = 0x40000, scoped, tag = 'output window, operand 0']
    #allocation3 [shape = 's32[2]{0}', space=sflag, size = 0x8, scoped, tag = 'scoped memory for patch_embed_forward.1']
    %10 = vsyncpa [#allocation3], 0
    %s11 = scalar_lea.sflag [#allocation3], 1
    %12 = vsyncpa %s11, 0
    loop: start=0, step=1, limit=4
    $region2: #{patch_embed_forward.1} parent=1 // loop_pre_header
      _
    $region3: #{patch_embed_forward.1} parent=1 // loop_header
      %s14 = sphi 0, %s18
      %p15 = scmp.ge.s32.totalorder %s14, 4
      %s24 = sphi 0, %s26
      %s27 = sphi 0, %s24
      %s28 = sphi 0, %s27
      %s44 = sphi 0, %s28
      %s48 = sphi 0, %s48
      %s50 = sphi 0, %s48
      %s51 = sphi 0, %s50
      %s65 = sphi 0, %s51
      %s69 = sphi 0, %s69
      %s71 = sphi 0, %s69
      %s72 = sphi 0, %s71
      %s86 = sphi 0, %s72
      %s90 = sphi 0, %s90
      %s92 = sphi 0, %s90
      %s93 = sphi 0, %s92
      %s107 = sphi 0, %s93
      %s111 = sphi 0, %s111
      %s113 = sphi 0, %s111
      %s114 = sphi 0, %s113
      %s128 = sphi 0, %s114
      %s134 = sphi 0, %s136
      %s137 = sphi 0, %s134
      %s138 = sphi 0, %s137
      %s154 = sphi 0, %s138
    $region4: #{patch_embed_forward.1} parent=1 // loop_header_branch
      %17 = sbr.rel (%p15) target = $region8
    $region5: #{patch_embed_forward.1} parent=1 // loop_body
      %s19 = ssub.s32 %s14, 1
      %s20 = ssub.s32 %s14, 2
      %s21 = sadd.s32 %s14, 1
      %s22 = ssub.s32 %s14, %s21
      %p23 = scmp.eq.s32.totalorder %s22, 0
      %s25 = sadd.s32 %s24, 1
      %s26 = scalar_select %p23, %s24, %s25
      %p29 = pneg %p23
      %p30 = scmp.eq.s32.totalorder %s14, 1
      %p31 = por %p29, %p30
      %p32 = scmp.ne.s32.totalorder %s24, %s27
      %p33 = scmp.eq.s32.totalorder %s14, 0
      %p34 = por %p32, %p33
      %p35 = scmp.ne.s32.totalorder %s24, %s27
      %p36 = scmp.eq.s32.totalorder %s19, 1
      %p37 = por %p35, %p36
      %p38 = scmp.ne.s32.totalorder %s27, %s28
      %p39 = scmp.eq.s32.totalorder %s19, 0
      %p40 = por %p38, %p39
      %p41 = scmp.ne.s32.totalorder %s27, %s28
      %p42 = scmp.eq.s32.totalorder %s20, 1
      %p43 = por %p41, %p42
      %p45 = scmp.ne.s32.totalorder %s28, %s44
      %p46 = scmp.eq.s32.totalorder %s20, 0
      %p47 = por %p45, %p46
      %s49 = sadd.s32 %s48, 1
      %p52 = scmp.eq.s32.totalorder %s14, 1
      %p53 = scmp.ne.s32.totalorder %s48, %s50
      %p54 = scmp.eq.s32.totalorder %s14, 0
      %p55 = por %p53, %p54
      %p56 = scmp.ne.s32.totalorder %s48, %s50
      %p57 = scmp.eq.s32.totalorder %s19, 1
      %p58 = por %p56, %p57
      %p59 = scmp.ne.s32.totalorder %s50, %s51
      %p60 = scmp.eq.s32.totalorder %s19, 0
      %p61 = por %p59, %p60
      %p62 = scmp.ne.s32.totalorder %s50, %s51
      %p63 = scmp.eq.s32.totalorder %s20, 1
      %p64 = por %p62, %p63
      %p66 = scmp.ne.s32.totalorder %s51, %s65
      %p67 = scmp.eq.s32.totalorder %s20, 0
      %p68 = por %p66, %p67
      %s70 = sadd.s32 %s69, 1
      %p73 = scmp.eq.s32.totalorder %s14, 1
      %p74 = scmp.ne.s32.totalorder %s69, %s71
      %p75 = scmp.eq.s32.totalorder %s14, 0
      %p76 = por %p74, %p75
      %p77 = scmp.ne.s32.totalorder %s69, %s71
      %p78 = scmp.eq.s32.totalorder %s19, 1
      %p79 = por %p77, %p78
      %p80 = scmp.ne.s32.totalorder %s71, %s72
      %p81 = scmp.eq.s32.totalorder %s19, 0
      %p82 = por %p80, %p81
      %p83 = scmp.ne.s32.totalorder %s71, %s72
      %p84 = scmp.eq.s32.totalorder %s20, 1
      %p85 = por %p83, %p84
      %p87 = scmp.ne.s32.totalorder %s72, %s86
      %p88 = scmp.eq.s32.totalorder %s20, 0
      %p89 = por %p87, %p88
      %s91 = sadd.s32 %s90, 1
      %p94 = scmp.eq.s32.totalorder %s14, 1
      %p95 = scmp.ne.s32.totalorder %s90, %s92
      %p96 = scmp.eq.s32.totalorder %s14, 0
      %p97 = por %p95, %p96
      %p98 = scmp.ne.s32.totalorder %s90, %s92
      %p99 = scmp.eq.s32.totalorder %s19, 1
      %p100 = por %p98, %p99
      %p101 = scmp.ne.s32.totalorder %s92, %s93
      %p102 = scmp.eq.s32.totalorder %s19, 0
      %p103 = por %p101, %p102
      %p104 = scmp.ne.s32.totalorder %s92, %s93
      %p105 = scmp.eq.s32.totalorder %s20, 1
      %p106 = por %p104, %p105
      %p108 = scmp.ne.s32.totalorder %s93, %s107
      %p109 = scmp.eq.s32.totalorder %s20, 0
      %p110 = por %p108, %p109
      %s112 = sadd.s32 %s111, 1
      %p115 = scmp.eq.s32.totalorder %s14, 1
      %p116 = scmp.ne.s32.totalorder %s111, %s113
      %p117 = scmp.eq.s32.totalorder %s14, 0
      %p118 = por %p116, %p117
      %p119 = scmp.ne.s32.totalorder %s111, %s113
      %p120 = scmp.eq.s32.totalorder %s19, 1
      %p121 = por %p119, %p120
      %p122 = scmp.ne.s32.totalorder %s113, %s114
      %p123 = scmp.eq.s32.totalorder %s19, 0
      %p124 = por %p122, %p123
      %p125 = scmp.ne.s32.totalorder %s113, %s114
      %p126 = scmp.eq.s32.totalorder %s20, 1
      %p127 = por %p125, %p126
      %p129 = scmp.ne.s32.totalorder %s114, %s128
      %p130 = scmp.eq.s32.totalorder %s20, 0
      %p131 = por %p129, %p130
      %s132 = ssub.s32 %s14, %s21
      %p133 = scmp.eq.s32.totalorder %s132, 0
      %s135 = sadd.s32 %s134, 1
      %s136 = scalar_select %p133, %s134, %s135
      %p139 = pneg %p133
      %p140 = scmp.eq.s32.totalorder %s14, 1
      %p141 = por %p139, %p140
      %p142 = scmp.ne.s32.totalorder %s134, %s137
      %p143 = scmp.eq.s32.totalorder %s14, 0
      %p144 = por %p142, %p143
      %p145 = scmp.ne.s32.totalorder %s134, %s137
      %p146 = scmp.eq.s32.totalorder %s19, 1
      %p147 = por %p145, %p146
      %p148 = scmp.ne.s32.totalorder %s137, %s138
      %p149 = scmp.eq.s32.totalorder %s19, 0
      %p150 = por %p148, %p149
      %p151 = scmp.ne.s32.totalorder %s137, %s138
      %p152 = scmp.eq.s32.totalorder %s20, 1
      %p153 = por %p151, %p152
      %p155 = scmp.ne.s32.totalorder %s138, %s154
      %p156 = scmp.eq.s32.totalorder %s20, 0
      %p157 = por %p155, %p156
      %p158 = scmp.le.s32.totalorder 1, %s14
      %p159 = scmp.lt.s32.totalorder %s14, 3
      %p160 = pnand %p158, %p159
      %p161 = pneg %p160
      // Predicated region
      $region9: #{patch_embed_forward.1} parent=5 // pred_check
        _
      $region10: #{patch_embed_forward.1} parent=5 // pred_check_branch
        %163 = sbr.rel (%p160) target = $region12
      $region11: #{patch_embed_forward.1} parent=5 // pred_region
        %s164 = ssub.s32 %s14, 1
        // Predicated region
        $region13: #{patch_embed_forward.1} parent=11 // pred_check
          %p165 = pneg %p61
        $region14: #{patch_embed_forward.1} parent=11 // pred_check_branch
          %167 = sbr.rel (%p165) target = $region16
        $region15: #{patch_embed_forward.1} parent=11 // pred_region
          _
        $region16: #{patch_embed_forward.1} parent=11 // pred_fallthru
          _
        // Predicated region
        $region17: #{patch_embed_forward.1} parent=11 // pred_check
          %p168 = pneg %p82
        $region18: #{patch_embed_forward.1} parent=11 // pred_check_branch
          %170 = sbr.rel (%p168) target = $region20
        $region19: #{patch_embed_forward.1} parent=11 // pred_region
          _
        $region20: #{patch_embed_forward.1} parent=11 // pred_fallthru
          _
        // Predicated region
        $region21: #{patch_embed_forward.1} parent=11 // pred_check
          %p171 = pneg %p103
        $region22: #{patch_embed_forward.1} parent=11 // pred_check_branch
          %173 = sbr.rel (%p171) target = $region24
        $region23: #{patch_embed_forward.1} parent=11 // pred_region
          _
        $region24: #{patch_embed_forward.1} parent=11 // pred_fallthru
          _
        // Predicated region
        $region25: #{patch_embed_forward.1} parent=11 // pred_check
          %p174 = pneg %p124
        $region26: #{patch_embed_forward.1} parent=11 // pred_check_branch
          %176 = sbr.rel (%p174) target = $region28
        $region27: #{patch_embed_forward.1} parent=11 // pred_region
          _
        $region28: #{patch_embed_forward.1} parent=11 // pred_fallthru
          _
      $region12: #{patch_embed_forward.1} parent=5 // pred_fallthru
        _
      %p177 = scmp.lt.s32.totalorder %s14, 2
      // Predicated region
      $region29: #{patch_embed_forward.1} parent=5 // pred_check
        %p178 = pneg %p177
      $region30: #{patch_embed_forward.1} parent=5 // pred_check_branch
        %180 = sbr.rel (%p178) target = $region32
      $region31: #{patch_embed_forward.1} parent=5 // pred_region
        // Predicated region
        $region33: #{patch_embed_forward.1} parent=31 // pred_check
          %p181 = pneg %p34
        $region34: #{patch_embed_forward.1} parent=31 // pred_check_branch
          %183 = sbr.rel (%p181) target = $region36
        $region35: #{patch_embed_forward.1} parent=31 // pred_region
          %s184 = smul.u32 32, %s14
          %p185 = scmp.lt.s32.totalorder %s184, 63
          %s186 = scalar_select %p185, %s184, 63
          %s187 = smul.addr %s186, 4
          %s188 = scalar_lea.vmem %s0, %s187
          %s189 = smul.u32 32, %s14
        $region36: #{patch_embed_forward.1} parent=31 // pred_fallthru
          _
      $region32: #{patch_embed_forward.1} parent=5 // pred_fallthru
        _
      %p190 = scmp.le.s32.totalorder 1, %s14
      %p191 = scmp.lt.s32.totalorder %s14, 3
      %p192 = pnand %p190, %p191
      %p193 = pneg %p192
      // Predicated region
      $region37: #{patch_embed_forward.1} parent=5 // pred_check
        _
      $region38: #{patch_embed_forward.1} parent=5 // pred_check_branch
        %195 = sbr.rel (%p192) target = $region40
      $region39: #{patch_embed_forward.1} parent=5 // pred_region
        %s196 = ssub.s32 %s14, 1
        %s197 = smul.u32 32, %s19
        %p198 = scmp.lt.s32.totalorder %s197, 63
        %s199 = scalar_select %p198, %s197, 63
        %s200 = smul.addr %s199, 4
        %s201 = scalar_lea.vmem %s0, %s200
        %p202 = pneg %p40
        %p203 = pneg %p37
        %p204 = pneg %p61
        %p205 = pneg %p58
        %p206 = pneg %p82
        %p207 = pneg %p79
        %p208 = pneg %p103
        %p209 = pneg %p100
        %p210 = pneg %p124
        %p211 = pneg %p121
        %p212 = pneg %p150
        %p213 = pneg %p147
        %s214 = sand.u32 %s137, 1
        %s215 = scalar_lea.sflag [#allocation3], %s214
        %s216 = sand.u32 %s137, 1
        %s217 = smul.addr %s216, 256
        %s218 = scalar_lea.vmem [#allocation2], %s217
        %s219 = smul.u32 32, %s19
        %p220 = scmp.lt.s32.totalorder %s219, 63
        %s221 = scalar_select %p220, %s219, 63
        %s222 = smul.addr %s221, 4
        %s223 = scalar_lea.vmem %s0, %s222
        %s224 = smul.u32 32, %s19
        %s225 = smul.u32 32, %s19
        %v227 = vld [vmem:[%s223] sm:$0xf]
        %v228 = vld [vmem:[%s223 + $0x4] sm:$0xf]
        %v229 = vld [vmem:[%s223 + $0x8] sm:$0xf]
        %v230 = vld [vmem:[%s223 + $0xc] sm:$0xf]
        %v231 = vld [vmem:[%s223 + $0x10] sm:$0xf]
        %v232 = vld [vmem:[%s223 + $0x14] sm:$0xf]
        %v233 = vld [vmem:[%s223 + $0x18] sm:$0xf]
        %v234 = vld [vmem:[%s223 + $0x1c] sm:$0xf]
        %v235 = vld [vmem:[%s223 + $0x20] sm:$0xf]
        %v236 = vld [vmem:[%s223 + $0x24] sm:$0xf]
        %v237 = vld [vmem:[%s223 + $0x28] sm:$0xf]
        %v238 = vld [vmem:[%s223 + $0x2c] sm:$0xf]
        %v239 = vld [vmem:[%s223 + $0x30] sm:$0xf]
        %v240 = vld [vmem:[%s223 + $0x34] sm:$0xf]
        %v241 = vld [vmem:[%s223 + $0x38] sm:$0xf]
        %v242 = vld [vmem:[%s223 + $0x3c] sm:$0xf]
        %v243 = vld [vmem:[%s223 + $0x40] sm:$0xf]
        %v244 = vld [vmem:[%s223 + $0x44] sm:$0xf]
        %v245 = vld [vmem:[%s223 + $0x48] sm:$0xf]
        %v246 = vld [vmem:[%s223 + $0x4c] sm:$0xf]
        %v247 = vld [vmem:[%s223 + $0x50] sm:$0xf]
        %v248 = vld [vmem:[%s223 + $0x54] sm:$0xf]
        %v249 = vld [vmem:[%s223 + $0x58] sm:$0xf]
        %v250 = vld [vmem:[%s223 + $0x5c] sm:$0xf]
        %v251 = vld [vmem:[%s223 + $0x60] sm:$0xf]
        %v252 = vld [vmem:[%s223 + $0x64] sm:$0xf]
        %v253 = vld [vmem:[%s223 + $0x68] sm:$0xf]
        %v254 = vld [vmem:[%s223 + $0x6c] sm:$0xf]
        %v255 = vld [vmem:[%s223 + $0x70] sm:$0xf]
        %v256 = vld [vmem:[%s223 + $0x74] sm:$0xf]
        %v257 = vld [vmem:[%s223 + $0x78] sm:$0xf]
        %v258 = vld [vmem:[%s223 + $0x7c] sm:$0xf]
        %v259 = vld [vmem:[%s1] sm:$0xf]
        %v260 = vld [vmem:[%s1 + $0x4] sm:$0xf]
        %v261 = vld [vmem:[%s1 + $0x8] sm:$0xf]
        %v262 = vld [vmem:[%s1 + $0xc] sm:$0xf]
        %v263 = vld [vmem:[%s1 + $0x10] sm:$0xf]
        %v264 = vld [vmem:[%s1 + $0x14] sm:$0xf]
        %v265 = vld [vmem:[%s2] sm:$0x1]
        %v267 = vlaneseq
        %v268 = vshrl.u32 %v267, 7
        %v269 = vsub.s32 0, %v268
        %v270 = vrot.slane %v265, %v269
        %v304 = vunpack.c.l.b16 %v227
        %v305 = vunpack.c.l.b16 %v228
        %v306 = vunpack.c.l.b16 %v229
        %v307 = vunpack.c.l.b16 %v230
        %v308 = vunpack.c.l.b16 %v231
        %v309 = vunpack.c.l.b16 %v232
        %v310 = vunpack.c.l.b16 %v233
        %v311 = vunpack.c.l.b16 %v234
        %v312 = vunpack.c.l.b16 %v235
        %v313 = vunpack.c.l.b16 %v236
        %v314 = vunpack.c.l.b16 %v237
        %v315 = vunpack.c.l.b16 %v238
        %v316 = vunpack.c.l.b16 %v239
        %v317 = vunpack.c.l.b16 %v240
        %v318 = vunpack.c.l.b16 %v241
        %v319 = vunpack.c.l.b16 %v242
        %v320 = vunpack.c.l.b16 %v243
        %v321 = vunpack.c.l.b16 %v244
        %v322 = vunpack.c.l.b16 %v245
        %v323 = vunpack.c.l.b16 %v246
        %v324 = vunpack.c.l.b16 %v247
        %v325 = vunpack.c.l.b16 %v248
        %v326 = vunpack.c.l.b16 %v249
        %v327 = vunpack.c.l.b16 %v250
        %v328 = vunpack.c.l.b16 %v251
        %v329 = vunpack.c.l.b16 %v252
        %v330 = vunpack.c.l.b16 %v253
        %v331 = vunpack.c.l.b16 %v254
        %v332 = vunpack.c.l.b16 %v255
        %v333 = vunpack.c.l.b16 %v256
        %v334 = vunpack.c.l.b16 %v257
        %v335 = vunpack.c.l.b16 %v258
        %v336 = vpack.c.b16 %v305, %v304
        %v337 = vpack.c.b16 %v307, %v306
        %v338 = vpack.c.b16 %v309, %v308
        %v339 = vpack.c.b16 %v311, %v310
        %v340 = vpack.c.b16 %v313, %v312
        %v341 = vpack.c.b16 %v315, %v314
        %v342 = vpack.c.b16 %v317, %v316
        %v343 = vpack.c.b16 %v319, %v318
        %v344 = vpack.c.b16 %v321, %v320
        %v345 = vpack.c.b16 %v323, %v322
        %v346 = vpack.c.b16 %v325, %v324
        %v347 = vpack.c.b16 %v327, %v326
        %v348 = vpack.c.b16 %v329, %v328
        %v349 = vpack.c.b16 %v331, %v330
        %v350 = vpack.c.b16 %v333, %v332
        %v351 = vpack.c.b16 %v335, %v334
        %v358 = vunpack.c.l.b16 %v259
        %v359 = vunpack.c.l.b16 %v260
        %v360 = vunpack.c.l.b16 %v261
        %v361 = vunpack.c.l.b16 %v262
        %v362 = vunpack.c.l.b16 %v263
        %v363 = vunpack.c.l.b16 %v264
        %v364 = vpack.c.b16 %v359, %v358
        %v365 = vpack.c.b16 %v361, %v360
        %v366 = vpack.c.b16 %v363, %v362
        %vm370 = vcmask 392192
        %v372 = vsel %vm370, %v336, 0
        %v375 = vsel %vm370, %v337, 0
        %v378 = vsel %vm370, %v338, 0
        %v381 = vsel %vm370, %v339, 0
        %v384 = vsel %vm370, %v340, 0
        %v387 = vsel %vm370, %v341, 0
        %v390 = vsel %vm370, %v342, 0
        %v393 = vsel %vm370, %v343, 0
        %v396 = vsel %vm370, %v344, 0
        %v399 = vsel %vm370, %v345, 0
        %v402 = vsel %vm370, %v346, 0
        %v405 = vsel %vm370, %v347, 0
        %v408 = vsel %vm370, %v348, 0
        %v411 = vsel %vm370, %v349, 0
        %v414 = vsel %vm370, %v350, 0
        %v417 = vsel %vm370, %v351, 0
        %419 = vmatprep.subr.bf16.mxu0 0
        %420 = vmatpush1.bf16.msra.mxu0 0
        %421 = vmatprep.subr.bf16.mxu0 0
        %422 = vmatpush1.bf16.msra.mxu0 0
        %423 = vmatprep.subr.bf16.mxu0 0
        %424 = vmatpush1.bf16.msra.mxu0 0
        %425 = vmatprep.subr.bf16.mxu0 0
        %426 = vmatpush1.bf16.msra.mxu0 0
        %427 = vmatprep.subr.bf16.mxu0 0
        %428 = vmatpush1.bf16.msra.mxu0 0
        %429 = vmatprep.subr.bf16.mxu0 0
        %430 = vmatpush1.bf16.msra.mxu0 %v366
        %431 = vmatprep.subr.bf16.mxu0 0
        %432 = vmatpush1.bf16.msra.mxu0 %v365
        %433 = vmatprep.subr.bf16.mxu0 0
        %434 = vmatpush1.bf16.msra.mxu0 %v364
        %435 = vmatprep.subr.bf16.mxu0 0
        %436 = vmatpush2.bf16.msra.mxu0 0
        %437 = vmatprep.subr.bf16.mxu0 0
        %438 = vmatpush2.bf16.msra.mxu0 0
        %439 = vmatprep.subr.bf16.mxu0 0
        %440 = vmatpush2.bf16.msra.mxu0 0
        %441 = vmatprep.subr.bf16.mxu0 0
        %442 = vmatpush2.bf16.msra.mxu0 0
        %443 = vmatprep.subr.bf16.mxu0 0
        %444 = vmatpush2.bf16.msra.mxu0 0
        %445 = vmatprep.subr.bf16.mxu0 0
        %446 = vmatpush2.bf16.msra.mxu0 0
        %447 = vmatprep.subr.bf16.mxu0 0
        %448 = vmatpush2.bf16.msra.mxu0 0
        %449 = vmatprep.subr.bf16.mxu0 0
        %450 = vmatpush2.bf16.msra.mxu0 0
        %451 = vmatprep.mubr.bf16.mxu0 0
        %452 = vmatmul.mubr.bf16.gmra.mxu0 %v372
        %v453 = vpop.f32.mrf.mxu0
        %v454 = vadd.f32 %v270, %v453
        %v455 = vpop.f32.mrf.mxu0
        %v456 = vpop.f32.mrf.mxu0
        %v457 = vadd.f32 %v270, %v456
        %v458 = vpop.f32.mrf.mxu0
        %459 = vmatprep.mubr.bf16.mxu0 0
        %460 = vmatmul.mubr.bf16.gmra.mxu0 %v375
        %v461 = vpop.f32.mrf.mxu0
        %v462 = vadd.f32 %v270, %v461
        %v463 = vpop.f32.mrf.mxu0
        %v464 = vpop.f32.mrf.mxu0
        %v465 = vadd.f32 %v270, %v464
        %v466 = vpop.f32.mrf.mxu0
        %467 = vmatprep.mubr.bf16.mxu0 0
        %468 = vmatmul.mubr.bf16.gmra.mxu0 %v378
        %v469 = vpop.f32.mrf.mxu0
        %v470 = vadd.f32 %v270, %v469
        %v471 = vpop.f32.mrf.mxu0
        %v472 = vpop.f32.mrf.mxu0
        %v473 = vadd.f32 %v270, %v472
        %v474 = vpop.f32.mrf.mxu0
        %475 = vmatprep.mubr.bf16.mxu0 0
        %476 = vmatmul.mubr.bf16.gmra.mxu0 %v381
        %v477 = vpop.f32.mrf.mxu0
        %v478 = vadd.f32 %v270, %v477
        %v479 = vpop.f32.mrf.mxu0
        %v480 = vpop.f32.mrf.mxu0
        %v481 = vadd.f32 %v270, %v480
        %v482 = vpop.f32.mrf.mxu0
        %483 = vmatprep.mubr.bf16.mxu0 0
        %484 = vmatmul.mubr.bf16.gmra.mxu0 %v384
        %v485 = vpop.f32.mrf.mxu0
        %v486 = vadd.f32 %v270, %v485
        %v487 = vpop.f32.mrf.mxu0
        %v488 = vpop.f32.mrf.mxu0
        %v489 = vadd.f32 %v270, %v488
        %v490 = vpop.f32.mrf.mxu0
        %491 = vmatprep.mubr.bf16.mxu0 0
        %492 = vmatmul.mubr.bf16.gmra.mxu0 %v387
        %v493 = vpop.f32.mrf.mxu0
        %v494 = vadd.f32 %v270, %v493
        %v495 = vpop.f32.mrf.mxu0
        %v496 = vpop.f32.mrf.mxu0
        %v497 = vadd.f32 %v270, %v496
        %v498 = vpop.f32.mrf.mxu0
        %499 = vmatprep.mubr.bf16.mxu0 0
        %500 = vmatmul.mubr.bf16.gmra.mxu0 %v390
        %v501 = vpop.f32.mrf.mxu0
        %v502 = vadd.f32 %v270, %v501
        %v503 = vpop.f32.mrf.mxu0
        %v504 = vpop.f32.mrf.mxu0
        %v505 = vadd.f32 %v270, %v504
        %v506 = vpop.f32.mrf.mxu0
        %507 = vmatprep.mubr.bf16.mxu0 0
        %508 = vmatmul.mubr.bf16.gmra.mxu0 %v393
        %v509 = vpop.f32.mrf.mxu0
        %v510 = vadd.f32 %v270, %v509
        %v511 = vpop.f32.mrf.mxu0
        %v512 = vpop.f32.mrf.mxu0
        %v513 = vadd.f32 %v270, %v512
        %v514 = vpop.f32.mrf.mxu0
        %515 = vmatprep.mubr.bf16.mxu0 0
        %516 = vmatmul.mubr.bf16.gmra.mxu0 %v396
        %v517 = vpop.f32.mrf.mxu0
        %v518 = vadd.f32 %v270, %v517
        %v519 = vpop.f32.mrf.mxu0
        %v520 = vpop.f32.mrf.mxu0
        %v521 = vadd.f32 %v270, %v520
        %v522 = vpop.f32.mrf.mxu0
        %523 = vmatprep.mubr.bf16.mxu0 0
        %524 = vmatmul.mubr.bf16.gmra.mxu0 %v399
        %v525 = vpop.f32.mrf.mxu0
        %v526 = vadd.f32 %v270, %v525
        %v527 = vpop.f32.mrf.mxu0
        %v528 = vpop.f32.mrf.mxu0
        %v529 = vadd.f32 %v270, %v528
        %v530 = vpop.f32.mrf.mxu0
        %531 = vmatprep.mubr.bf16.mxu0 0
        %532 = vmatmul.mubr.bf16.gmra.mxu0 %v402
        %v533 = vpop.f32.mrf.mxu0
        %v534 = vadd.f32 %v270, %v533
        %v535 = vpop.f32.mrf.mxu0
        %v536 = vpop.f32.mrf.mxu0
        %v537 = vadd.f32 %v270, %v536
        %v538 = vpop.f32.mrf.mxu0
        %539 = vmatprep.mubr.bf16.mxu0 0
        %540 = vmatmul.mubr.bf16.gmra.mxu0 %v405
        %v541 = vpop.f32.mrf.mxu0
        %v542 = vadd.f32 %v270, %v541
        %v543 = vpop.f32.mrf.mxu0
        %v544 = vpop.f32.mrf.mxu0
        %v545 = vadd.f32 %v270, %v544
        %v546 = vpop.f32.mrf.mxu0
        %547 = vmatprep.mubr.bf16.mxu0 0
        %548 = vmatmul.mubr.bf16.gmra.mxu0 %v408
        %v549 = vpop.f32.mrf.mxu0
        %v550 = vadd.f32 %v270, %v549
        %v551 = vpop.f32.mrf.mxu0
        %v552 = vpop.f32.mrf.mxu0
        %v553 = vadd.f32 %v270, %v552
        %v554 = vpop.f32.mrf.mxu0
        %555 = vmatprep.mubr.bf16.mxu0 0
        %556 = vmatmul.mubr.bf16.gmra.mxu0 %v411
        %v557 = vpop.f32.mrf.mxu0
        %v558 = vadd.f32 %v270, %v557
        %v559 = vpop.f32.mrf.mxu0
        %v560 = vpop.f32.mrf.mxu0
        %v561 = vadd.f32 %v270, %v560
        %v562 = vpop.f32.mrf.mxu0
        %563 = vmatprep.mubr.bf16.mxu0 0
        %564 = vmatmul.mubr.bf16.gmra.mxu0 %v414
        %v565 = vpop.f32.mrf.mxu0
        %v566 = vadd.f32 %v270, %v565
        %v567 = vpop.f32.mrf.mxu0
        %v568 = vpop.f32.mrf.mxu0
        %v569 = vadd.f32 %v270, %v568
        %v570 = vpop.f32.mrf.mxu0
        %571 = vmatprep.mubr.bf16.mxu0 0
        %572 = vmatmul.mubr.bf16.gmra.mxu0 %v417
        %v573 = vpop.f32.mrf.mxu0
        %v574 = vadd.f32 %v270, %v573
        %v575 = vpop.f32.mrf.mxu0
        %v576 = vpop.f32.mrf.mxu0
        %v577 = vadd.f32 %v270, %v576
        %v578 = vpop.f32.mrf.mxu0
        %579 = vdwg.mxu0
        %580 = vadd.xlane.f32.xlu0 %v454
        %v581 = vpop.xlane.xlu0 %580
        %582 = vadd.xlane.f32.xlu0 %v457
        %v583 = vpop.xlane.xlu0 %582
        %584 = vadd.xlane.f32.xlu0 %v462
        %v585 = vpop.xlane.xlu0 %584
        %586 = vadd.xlane.f32.xlu0 %v465
        %v587 = vpop.xlane.xlu0 %586
        %588 = vadd.xlane.f32.xlu0 %v470
        %v589 = vpop.xlane.xlu0 %588
        %590 = vadd.xlane.f32.xlu0 %v473
        %v591 = vpop.xlane.xlu0 %590
        %592 = vadd.xlane.f32.xlu0 %v478
        %v593 = vpop.xlane.xlu0 %592
        %594 = vadd.xlane.f32.xlu0 %v481
        %v595 = vpop.xlane.xlu0 %594
        %596 = vadd.xlane.f32.xlu0 %v486
        %v597 = vpop.xlane.xlu0 %596
        %598 = vadd.xlane.f32.xlu0 %v489
        %v599 = vpop.xlane.xlu0 %598
        %600 = vadd.xlane.f32.xlu0 %v494
        %v601 = vpop.xlane.xlu0 %600
        %602 = vadd.xlane.f32.xlu0 %v497
        %v603 = vpop.xlane.xlu0 %602
        %604 = vadd.xlane.f32.xlu0 %v502
        %v605 = vpop.xlane.xlu0 %604
        %606 = vadd.xlane.f32.xlu0 %v505
        %v607 = vpop.xlane.xlu0 %606
        %608 = vadd.xlane.f32.xlu0 %v510
        %v609 = vpop.xlane.xlu0 %608
        %610 = vadd.xlane.f32.xlu0 %v513
        %v611 = vpop.xlane.xlu0 %610
        %612 = vadd.xlane.f32.xlu0 %v518
        %v613 = vpop.xlane.xlu0 %612
        %614 = vadd.xlane.f32.xlu0 %v521
        %v615 = vpop.xlane.xlu0 %614
        %616 = vadd.xlane.f32.xlu0 %v526
        %v617 = vpop.xlane.xlu0 %616
        %618 = vadd.xlane.f32.xlu0 %v529
        %v619 = vpop.xlane.xlu0 %618
        %620 = vadd.xlane.f32.xlu0 %v534
        %v621 = vpop.xlane.xlu0 %620
        %622 = vadd.xlane.f32.xlu0 %v537
        %v623 = vpop.xlane.xlu0 %622
        %624 = vadd.xlane.f32.xlu0 %v542
        %v625 = vpop.xlane.xlu0 %624
        %626 = vadd.xlane.f32.xlu0 %v545
        %v627 = vpop.xlane.xlu0 %626
        %628 = vadd.xlane.f32.xlu0 %v550
        %v629 = vpop.xlane.xlu0 %628
        %630 = vadd.xlane.f32.xlu0 %v553
        %v631 = vpop.xlane.xlu0 %630
        %632 = vadd.xlane.f32.xlu0 %v558
        %v633 = vpop.xlane.xlu0 %632
        %634 = vadd.xlane.f32.xlu0 %v561
        %v635 = vpop.xlane.xlu0 %634
        %636 = vadd.xlane.f32.xlu0 %v566
        %v637 = vpop.xlane.xlu0 %636
        %638 = vadd.xlane.f32.xlu0 %v569
        %v639 = vpop.xlane.xlu0 %638
        %640 = vadd.xlane.f32.xlu0 %v574
        %v641 = vpop.xlane.xlu0 %640
        %642 = vadd.xlane.f32.xlu0 %v577
        %v643 = vpop.xlane.xlu0 %642
        %v644 = vrcp.pop 128.0
        %v645 = vmul.f32 %v581, %v644
        %v646 = vmul.f32 %v583, %v644
        %v647 = vmul.f32 %v585, %v644
        %v648 = vmul.f32 %v587, %v644
        %v649 = vmul.f32 %v589, %v644
        %v650 = vmul.f32 %v591, %v644
        %v651 = vmul.f32 %v593, %v644
        %v652 = vmul.f32 %v595, %v644
        %v653 = vmul.f32 %v597, %v644
        %v654 = vmul.f32 %v599, %v644
        %v655 = vmul.f32 %v601, %v644
        %v656 = vmul.f32 %v603, %v644
        %v657 = vmul.f32 %v605, %v644
        %v658 = vmul.f32 %v607, %v644
        %v659 = vmul.f32 %v609, %v644
        %v660 = vmul.f32 %v611, %v644
        %v661 = vmul.f32 %v613, %v644
        %v662 = vmul.f32 %v615, %v644
        %v663 = vmul.f32 %v617, %v644
        %v664 = vmul.f32 %v619, %v644
        %v665 = vmul.f32 %v621, %v644
        %v666 = vmul.f32 %v623, %v644
        %v667 = vmul.f32 %v625, %v644
        %v668 = vmul.f32 %v627, %v644
        %v669 = vmul.f32 %v629, %v644
        %v670 = vmul.f32 %v631, %v644
        %v671 = vmul.f32 %v633, %v644
        %v672 = vmul.f32 %v635, %v644
        %v673 = vmul.f32 %v637, %v644
        %v674 = vmul.f32 %v639, %v644
        %v675 = vmul.f32 %v641, %v644
        %v676 = vmul.f32 %v643, %v644
        %v677 = vsub.f32 %v454, %v645
        %v678 = vsub.f32 %v457, %v646
        %v679 = vsub.f32 %v462, %v647
        %v680 = vsub.f32 %v465, %v648
        %v681 = vsub.f32 %v470, %v649
        %v682 = vsub.f32 %v473, %v650
        %v683 = vsub.f32 %v478, %v651
        %v684 = vsub.f32 %v481, %v652
        %v685 = vsub.f32 %v486, %v653
        %v686 = vsub.f32 %v489, %v654
        %v687 = vsub.f32 %v494, %v655
        %v688 = vsub.f32 %v497, %v656
        %v689 = vsub.f32 %v502, %v657
        %v690 = vsub.f32 %v505, %v658
        %v691 = vsub.f32 %v510, %v659
        %v692 = vsub.f32 %v513, %v660
        %v693 = vsub.f32 %v518, %v661
        %v694 = vsub.f32 %v521, %v662
        %v695 = vsub.f32 %v526, %v663
        %v696 = vsub.f32 %v529, %v664
        %v697 = vsub.f32 %v534, %v665
        %v698 = vsub.f32 %v537, %v666
        %v699 = vsub.f32 %v542, %v667
        %v700 = vsub.f32 %v545, %v668
        %v701 = vsub.f32 %v550, %v669
        %v702 = vsub.f32 %v553, %v670
        %v703 = vsub.f32 %v558, %v671
        %v704 = vsub.f32 %v561, %v672
        %v705 = vsub.f32 %v566, %v673
        %v706 = vsub.f32 %v569, %v674
        %v707 = vsub.f32 %v574, %v675
        %v708 = vsub.f32 %v577, %v676
        %v709 = vmul.f32 %v677, %v677
        %v710 = vmul.f32 %v678, %v678
        %v711 = vmul.f32 %v679, %v679
        %v712 = vmul.f32 %v680, %v680
        %v713 = vmul.f32 %v681, %v681
        %v714 = vmul.f32 %v682, %v682
        %v715 = vmul.f32 %v683, %v683
        %v716 = vmul.f32 %v684, %v684
        %v717 = vmul.f32 %v685, %v685
        %v718 = vmul.f32 %v686, %v686
        %v719 = vmul.f32 %v687, %v687
        %v720 = vmul.f32 %v688, %v688
        %v721 = vmul.f32 %v689, %v689
        %v722 = vmul.f32 %v690, %v690
        %v723 = vmul.f32 %v691, %v691
        %v724 = vmul.f32 %v692, %v692
        %v725 = vmul.f32 %v693, %v693
        %v726 = vmul.f32 %v694, %v694
        %v727 = vmul.f32 %v695, %v695
        %v728 = vmul.f32 %v696, %v696
        %v729 = vmul.f32 %v697, %v697
        %v730 = vmul.f32 %v698, %v698
        %v731 = vmul.f32 %v699, %v699
        %v732 = vmul.f32 %v700, %v700
        %v733 = vmul.f32 %v701, %v701
        %v734 = vmul.f32 %v702, %v702
        %v735 = vmul.f32 %v703, %v703
        %v736 = vmul.f32 %v704, %v704
        %v737 = vmul.f32 %v705, %v705
        %v738 = vmul.f32 %v706, %v706
        %v739 = vmul.f32 %v707, %v707
        %v740 = vmul.f32 %v708, %v708
        %741 = vadd.xlane.f32.xlu0 %v709
        %v742 = vpop.xlane.xlu0 %741
        %743 = vadd.xlane.f32.xlu0 %v710
        %v744 = vpop.xlane.xlu0 %743
        %745 = vadd.xlane.f32.xlu0 %v711
        %v746 = vpop.xlane.xlu0 %745
        %747 = vadd.xlane.f32.xlu0 %v712
        %v748 = vpop.xlane.xlu0 %747
        %749 = vadd.xlane.f32.xlu0 %v713
        %v750 = vpop.xlane.xlu0 %749
        %751 = vadd.xlane.f32.xlu0 %v714
        %v752 = vpop.xlane.xlu0 %751
        %753 = vadd.xlane.f32.xlu0 %v715
        %v754 = vpop.xlane.xlu0 %753
        %755 = vadd.xlane.f32.xlu0 %v716
        %v756 = vpop.xlane.xlu0 %755
        %757 = vadd.xlane.f32.xlu0 %v717
        %v758 = vpop.xlane.xlu0 %757
        %759 = vadd.xlane.f32.xlu0 %v718
        %v760 = vpop.xlane.xlu0 %759
        %761 = vadd.xlane.f32.xlu0 %v719
        %v762 = vpop.xlane.xlu0 %761
        %763 = vadd.xlane.f32.xlu0 %v720
        %v764 = vpop.xlane.xlu0 %763
        %765 = vadd.xlane.f32.xlu0 %v721
        %v766 = vpop.xlane.xlu0 %765
        %767 = vadd.xlane.f32.xlu0 %v722
        %v768 = vpop.xlane.xlu0 %767
        %769 = vadd.xlane.f32.xlu0 %v723
        %v770 = vpop.xlane.xlu0 %769
        %771 = vadd.xlane.f32.xlu0 %v724
        %v772 = vpop.xlane.xlu0 %771
        %773 = vadd.xlane.f32.xlu0 %v725
        %v774 = vpop.xlane.xlu0 %773
        %775 = vadd.xlane.f32.xlu0 %v726
        %v776 = vpop.xlane.xlu0 %775
        %777 = vadd.xlane.f32.xlu0 %v727
        %v778 = vpop.xlane.xlu0 %777
        %779 = vadd.xlane.f32.xlu0 %v728
        %v780 = vpop.xlane.xlu0 %779
        %781 = vadd.xlane.f32.xlu0 %v729
        %v782 = vpop.xlane.xlu0 %781
        %783 = vadd.xlane.f32.xlu0 %v730
        %v784 = vpop.xlane.xlu0 %783
        %785 = vadd.xlane.f32.xlu0 %v731
        %v786 = vpop.xlane.xlu0 %785
        %787 = vadd.xlane.f32.xlu0 %v732
        %v788 = vpop.xlane.xlu0 %787
        %789 = vadd.xlane.f32.xlu0 %v733
        %v790 = vpop.xlane.xlu0 %789
        %791 = vadd.xlane.f32.xlu0 %v734
        %v792 = vpop.xlane.xlu0 %791
        %793 = vadd.xlane.f32.xlu0 %v735
        %v794 = vpop.xlane.xlu0 %793
        %795 = vadd.xlane.f32.xlu0 %v736
        %v796 = vpop.xlane.xlu0 %795
        %797 = vadd.xlane.f32.xlu0 %v737
        %v798 = vpop.xlane.xlu0 %797
        %799 = vadd.xlane.f32.xlu0 %v738
        %v800 = vpop.xlane.xlu0 %799
        %801 = vadd.xlane.f32.xlu0 %v739
        %v802 = vpop.xlane.xlu0 %801
        %803 = vadd.xlane.f32.xlu0 %v740
        %v804 = vpop.xlane.xlu0 %803
        %v805 = vmul.f32 %v742, %v644
        %v806 = vmul.f32 %v744, %v644
        %v807 = vmul.f32 %v746, %v644
        %v808 = vmul.f32 %v748, %v644
        %v809 = vmul.f32 %v750, %v644
        %v810 = vmul.f32 %v752, %v644
        %v811 = vmul.f32 %v754, %v644
        %v812 = vmul.f32 %v756, %v644
        %v813 = vmul.f32 %v758, %v644
        %v814 = vmul.f32 %v760, %v644
        %v815 = vmul.f32 %v762, %v644
        %v816 = vmul.f32 %v764, %v644
        %v817 = vmul.f32 %v766, %v644
        %v818 = vmul.f32 %v768, %v644
        %v819 = vmul.f32 %v770, %v644
        %v820 = vmul.f32 %v772, %v644
        %v821 = vmul.f32 %v774, %v644
        %v822 = vmul.f32 %v776, %v644
        %v823 = vmul.f32 %v778, %v644
        %v824 = vmul.f32 %v780, %v644
        %v825 = vmul.f32 %v782, %v644
        %v826 = vmul.f32 %v784, %v644
        %v827 = vmul.f32 %v786, %v644
        %v828 = vmul.f32 %v788, %v644
        %v829 = vmul.f32 %v790, %v644
        %v830 = vmul.f32 %v792, %v644
        %v831 = vmul.f32 %v794, %v644
        %v832 = vmul.f32 %v796, %v644
        %v833 = vmul.f32 %v798, %v644
        %v834 = vmul.f32 %v800, %v644
        %v835 = vmul.f32 %v802, %v644
        %v836 = vmul.f32 %v804, %v644
        %v837 = vadd.f32 %v805, 1e-05
        %v838 = vadd.f32 %v806, 1e-05
        %v839 = vadd.f32 %v807, 1e-05
        %v840 = vadd.f32 %v808, 1e-05
        %v841 = vadd.f32 %v809, 1e-05
        %v842 = vadd.f32 %v810, 1e-05
        %v843 = vadd.f32 %v811, 1e-05
        %v844 = vadd.f32 %v812, 1e-05
        %v845 = vadd.f32 %v813, 1e-05
        %v846 = vadd.f32 %v814, 1e-05
        %v847 = vadd.f32 %v815, 1e-05
        %v848 = vadd.f32 %v816, 1e-05
        %v849 = vadd.f32 %v817, 1e-05
        %v850 = vadd.f32 %v818, 1e-05
        %v851 = vadd.f32 %v819, 1e-05
        %v852 = vadd.f32 %v820, 1e-05
        %v853 = vadd.f32 %v821, 1e-05
        %v854 = vadd.f32 %v822, 1e-05
        %v855 = vadd.f32 %v823, 1e-05
        %v856 = vadd.f32 %v824, 1e-05
        %v857 = vadd.f32 %v825, 1e-05
        %v858 = vadd.f32 %v826, 1e-05
        %v859 = vadd.f32 %v827, 1e-05
        %v860 = vadd.f32 %v828, 1e-05
        %v861 = vadd.f32 %v829, 1e-05
        %v862 = vadd.f32 %v830, 1e-05
        %v863 = vadd.f32 %v831, 1e-05
        %v864 = vadd.f32 %v832, 1e-05
        %v865 = vadd.f32 %v833, 1e-05
        %v866 = vadd.f32 %v834, 1e-05
        %v867 = vadd.f32 %v835, 1e-05
        %v868 = vadd.f32 %v836, 1e-05
        %v869 = vrsqrt.pop %v837
        %v870 = vrsqrt.pop %v838
        %v871 = vrsqrt.pop %v839
        %v872 = vrsqrt.pop %v840
        %v873 = vrsqrt.pop %v841
        %v874 = vrsqrt.pop %v842
        %v875 = vrsqrt.pop %v843
        %v876 = vrsqrt.pop %v844
        %v877 = vrsqrt.pop %v845
        %v878 = vrsqrt.pop %v846
        %v879 = vrsqrt.pop %v847
        %v880 = vrsqrt.pop %v848
        %v881 = vrsqrt.pop %v849
        %v882 = vrsqrt.pop %v850
        %v883 = vrsqrt.pop %v851
        %v884 = vrsqrt.pop %v852
        %v885 = vrsqrt.pop %v853
        %v886 = vrsqrt.pop %v854
        %v887 = vrsqrt.pop %v855
        %v888 = vrsqrt.pop %v856
        %v889 = vrsqrt.pop %v857
        %v890 = vrsqrt.pop %v858
        %v891 = vrsqrt.pop %v859
        %v892 = vrsqrt.pop %v860
        %v893 = vrsqrt.pop %v861
        %v894 = vrsqrt.pop %v862
        %v895 = vrsqrt.pop %v863
        %v896 = vrsqrt.pop %v864
        %v897 = vrsqrt.pop %v865
        %v898 = vrsqrt.pop %v866
        %v899 = vrsqrt.pop %v867
        %v900 = vrsqrt.pop %v868
        %v901 = vmul.f32 %v677, %v869
        %v902 = vmul.f32 %v678, %v870
        %v903 = vmul.f32 %v679, %v871
        %v904 = vmul.f32 %v680, %v872
        %v905 = vmul.f32 %v681, %v873
        %v906 = vmul.f32 %v682, %v874
        %v907 = vmul.f32 %v683, %v875
        %v908 = vmul.f32 %v684, %v876
        %v909 = vmul.f32 %v685, %v877
        %v910 = vmul.f32 %v686, %v878
        %v911 = vmul.f32 %v687, %v879
        %v912 = vmul.f32 %v688, %v880
        %v913 = vmul.f32 %v689, %v881
        %v914 = vmul.f32 %v690, %v882
        %v915 = vmul.f32 %v691, %v883
        %v916 = vmul.f32 %v692, %v884
        %v917 = vmul.f32 %v693, %v885
        %v918 = vmul.f32 %v694, %v886
        %v919 = vmul.f32 %v695, %v887
        %v920 = vmul.f32 %v696, %v888
        %v921 = vmul.f32 %v697, %v889
        %v922 = vmul.f32 %v698, %v890
        %v923 = vmul.f32 %v699, %v891
        %v924 = vmul.f32 %v700, %v892
        %v925 = vmul.f32 %v701, %v893
        %v926 = vmul.f32 %v702, %v894
        %v927 = vmul.f32 %v703, %v895
        %v928 = vmul.f32 %v704, %v896
        %v929 = vmul.f32 %v705, %v897
        %v930 = vmul.f32 %v706, %v898
        %v931 = vmul.f32 %v707, %v899
        %v932 = vmul.f32 %v708, %v900
        %v933 = vld [vmem:[%s3] sm:$0x1]
        %v935 = vlaneseq
        %v936 = vshrl.u32 %v935, 7
        %v937 = vsub.s32 0, %v936
        %v938 = vrot.slane %v933, %v937
        %v940 = vmul.f32 %v901, %v938
        %v941 = vmul.f32 %v902, %v938
        %v942 = vmul.f32 %v903, %v938
        %v943 = vmul.f32 %v904, %v938
        %v944 = vmul.f32 %v905, %v938
        %v945 = vmul.f32 %v906, %v938
        %v946 = vmul.f32 %v907, %v938
        %v947 = vmul.f32 %v908, %v938
        %v948 = vmul.f32 %v909, %v938
        %v949 = vmul.f32 %v910, %v938
        %v950 = vmul.f32 %v911, %v938
        %v951 = vmul.f32 %v912, %v938
        %v952 = vmul.f32 %v913, %v938
        %v953 = vmul.f32 %v914, %v938
        %v954 = vmul.f32 %v915, %v938
        %v955 = vmul.f32 %v916, %v938
        %v956 = vmul.f32 %v917, %v938
        %v957 = vmul.f32 %v918, %v938
        %v958 = vmul.f32 %v919, %v938
        %v959 = vmul.f32 %v920, %v938
        %v960 = vmul.f32 %v921, %v938
        %v961 = vmul.f32 %v922, %v938
        %v962 = vmul.f32 %v923, %v938
        %v963 = vmul.f32 %v924, %v938
        %v964 = vmul.f32 %v925, %v938
        %v965 = vmul.f32 %v926, %v938
        %v966 = vmul.f32 %v927, %v938
        %v967 = vmul.f32 %v928, %v938
        %v968 = vmul.f32 %v929, %v938
        %v969 = vmul.f32 %v930, %v938
        %v970 = vmul.f32 %v931, %v938
        %v971 = vmul.f32 %v932, %v938
        %v972 = vld [vmem:[%s4] sm:$0x1]
        %v974 = vlaneseq
        %v975 = vshrl.u32 %v974, 7
        %v976 = vsub.s32 0, %v975
        %v977 = vrot.slane %v972, %v976
        %v979 = vadd.f32 %v940, %v977
        %v980 = vadd.f32 %v941, %v977
        %v981 = vadd.f32 %v942, %v977
        %v982 = vadd.f32 %v943, %v977
        %v983 = vadd.f32 %v944, %v977
        %v984 = vadd.f32 %v945, %v977
        %v985 = vadd.f32 %v946, %v977
        %v986 = vadd.f32 %v947, %v977
        %v987 = vadd.f32 %v948, %v977
        %v988 = vadd.f32 %v949, %v977
        %v989 = vadd.f32 %v950, %v977
        %v990 = vadd.f32 %v951, %v977
        %v991 = vadd.f32 %v952, %v977
        %v992 = vadd.f32 %v953, %v977
        %v993 = vadd.f32 %v954, %v977
        %v994 = vadd.f32 %v955, %v977
        %v995 = vadd.f32 %v956, %v977
        %v996 = vadd.f32 %v957, %v977
        %v997 = vadd.f32 %v958, %v977
        %v998 = vadd.f32 %v959, %v977
        %v999 = vadd.f32 %v960, %v977
        %v1000 = vadd.f32 %v961, %v977
        %v1001 = vadd.f32 %v962, %v977
        %v1002 = vadd.f32 %v963, %v977
        %v1003 = vadd.f32 %v964, %v977
        %v1004 = vadd.f32 %v965, %v977
        %v1005 = vadd.f32 %v966, %v977
        %v1006 = vadd.f32 %v967, %v977
        %v1007 = vadd.f32 %v968, %v977
        %v1008 = vadd.f32 %v969, %v977
        %v1009 = vadd.f32 %v970, %v977
        %v1010 = vadd.f32 %v971, %v977
        %1011 = vst [vmem:[%s218] sm:$0xff] %v979
        %1012 = vst [vmem:[%s218 + $0x8] sm:$0xff] %v980
        %1013 = vst [vmem:[%s218 + $0x10] sm:$0xff] %v981
        %1014 = vst [vmem:[%s218 + $0x18] sm:$0xff] %v982
        %1015 = vst [vmem:[%s218 + $0x20] sm:$0xff] %v983
        %1016 = vst [vmem:[%s218 + $0x28] sm:$0xff] %v984
        %1017 = vst [vmem:[%s218 + $0x30] sm:$0xff] %v985
        %1018 = vst [vmem:[%s218 + $0x38] sm:$0xff] %v986
        %1019 = vst [vmem:[%s218 + $0x40] sm:$0xff] %v987
        %1020 = vst [vmem:[%s218 + $0x48] sm:$0xff] %v988
        %1021 = vst [vmem:[%s218 + $0x50] sm:$0xff] %v989
        %1022 = vst [vmem:[%s218 + $0x58] sm:$0xff] %v990
        %1023 = vst [vmem:[%s218 + $0x60] sm:$0xff] %v991
        %1024 = vst [vmem:[%s218 + $0x68] sm:$0xff] %v992
        %1025 = vst [vmem:[%s218 + $0x70] sm:$0xff] %v993
        %1026 = vst [vmem:[%s218 + $0x78] sm:$0xff] %v994
        %1027 = vst [vmem:[%s218 + $0x80] sm:$0xff] %v995
        %1028 = vst [vmem:[%s218 + $0x88] sm:$0xff] %v996
        %1029 = vst [vmem:[%s218 + $0x90] sm:$0xff] %v997
        %1030 = vst [vmem:[%s218 + $0x98] sm:$0xff] %v998
        %1031 = vst [vmem:[%s218 + $0xa0] sm:$0xff] %v999
        %1032 = vst [vmem:[%s218 + $0xa8] sm:$0xff] %v1000
        %1033 = vst [vmem:[%s218 + $0xb0] sm:$0xff] %v1001
        %1034 = vst [vmem:[%s218 + $0xb8] sm:$0xff] %v1002
        %1035 = vst [vmem:[%s218 + $0xc0] sm:$0xff] %v1003
        %1036 = vst [vmem:[%s218 + $0xc8] sm:$0xff] %v1004
        %1037 = vst [vmem:[%s218 + $0xd0] sm:$0xff] %v1005
        %1038 = vst [vmem:[%s218 + $0xd8] sm:$0xff] %v1006
        %1039 = vst [vmem:[%s218 + $0xe0] sm:$0xff] %v1007
        %1040 = vst [vmem:[%s218 + $0xe8] sm:$0xff] %v1008
        %1041 = vst [vmem:[%s218 + $0xf0] sm:$0xff] %v1009
        %1042 = vst [vmem:[%s218 + $0xf8] sm:$0xff] %v1010
        %s1043 = sand.u32 %s137, 1
        %s1044 = scalar_lea.sflag [#allocation3], %s1043
        %s1045 = sand.u32 %s137, 1
        %s1046 = smul.addr %s1045, 256
        %s1047 = scalar_lea.vmem [#allocation2], %s1046
        // Predicated region
        $region41: #{patch_embed_forward.1} parent=39 // pred_check
          %p1048 = pneg %p147
        $region42: #{patch_embed_forward.1} parent=39 // pred_check_branch
          %1050 = sbr.rel (%p1048) target = $region44
        $region43: #{patch_embed_forward.1} parent=39 // pred_region
          %s1051 = smul.u32 32, %s19
          %s1053 = ssub.s32 4096, 4096
          %1054 = vsyncadd %s1044, %s1053
          %s1055 = smul.addr %s1051, 128
          %s1056 = scalar_lea.hbm %s5, %s1055
          %s1057 = sshll.u32 %s1047, 4
          %s1058 = int_to_ptr.vmem [resolvable:$true] %s1057
          %1063 = dma.vmem_to_hbm [thread:$0]  %s1058, 4096, %s1056, %s1044, 128, 128, 8
        $region44: #{patch_embed_forward.1} parent=39 // pred_fallthru
          _
      $region40: #{patch_embed_forward.1} parent=5 // pred_fallthru
        _
      %p1064 = scmp.le.s32.totalorder 2, %s14
      // Predicated region
      $region45: #{patch_embed_forward.1} parent=5 // pred_check
        %p1065 = pneg %p1064
      $region46: #{patch_embed_forward.1} parent=5 // pred_check_branch
        %1067 = sbr.rel (%p1065) target = $region48
      $region47: #{patch_embed_forward.1} parent=5 // pred_region
        %s1068 = ssub.s32 %s14, 2
        // Predicated region
        $region49: #{patch_embed_forward.1} parent=47 // pred_check
          %p1069 = pneg %p153
        $region50: #{patch_embed_forward.1} parent=47 // pred_check_branch
          %1071 = sbr.rel (%p1069) target = $region52
        $region51: #{patch_embed_forward.1} parent=47 // pred_region
          %s1072 = sand.u32 %s138, 1
          %s1073 = scalar_lea.sflag [#allocation3], %s1072
          %s1074 = sand.u32 %s138, 1
          %s1075 = smul.addr %s1074, 256
          %s1076 = scalar_lea.vmem [#allocation2], %s1075
          %1077 = dma.done %s1073, 4096
        $region52: #{patch_embed_forward.1} parent=47 // pred_fallthru
          _
      $region48: #{patch_embed_forward.1} parent=5 // pred_fallthru
        _
    $region6: #{patch_embed_forward.1} parent=1 // loop_footer
      %s18 = sadd.s32 1, %s14
    $region7: #{patch_embed_forward.1} parent=1 // loop_footer_branch
      %13 = sbr.rel target = $region3
    $region8: #{patch_embed_forward.1} parent=1 // loop_exit
      _
    %1078 = vsyncpa [#allocation3], 1
    %s1079 = scalar_lea.sflag [#allocation3], 1
    %1080 = vsyncpa %s1079, 1

</llo_original>
